<compile_context>
chip_gen: v5e
topology: v5e:2x2
jax: 0.10.0
libtpu: 0.0.40
codegen_flags: <defaults>
</compile_context>

<pallas_src>
import jax
import jax.numpy as jnp
from jax.experimental import pallas as pl
from jax.experimental.pallas import tpu as pltpu

HEIGHT = 3
LUMI_DIM = 1024


def _round_up(x, m):
    return ((x + m - 1) // m) * m


def _sublane(dtype):
    # min sublane multiple: 8 for 4-byte, 16 for 2-byte, 32 for 1-byte dtypes
    return max(8, 32 // jnp.dtype(dtype).itemsize)


# ---------------------------------------------------------------------------
# Prologue kernel (runs once): 3x Linear(1024 -> C) + softmax over height.
# ---------------------------------------------------------------------------
def eau_attn_kernel(l0, l1, l2, w0, w1, w2, b0, b1, b2, attn_ref):
    # l*: (B, 1024)  w*: (1024, C)  b*: (1, C)  attn_ref: (HEIGHT, B, C) f32
    logits = []
    for l, w, b in ((l0, w0, b0), (l1, w1, b1), (l2, w2, b2)):
        logits.append(
            jnp.dot(l[...], w[...], preferred_element_type=jnp.float32) + b[...]
        )
    logits = jnp.stack(logits, axis=0)                     # (HEIGHT, B, C)
    m = jnp.max(logits, axis=0, keepdims=True)
    e = jnp.exp(logits - m)
    attn_ref[...] = e / jnp.sum(e, axis=0, keepdims=True)


# ---------------------------------------------------------------------------
# Streaming kernel (tiled + auto-pipelined): out = sum_h attn[h] * x_h
# ---------------------------------------------------------------------------
def eau_weighted_sum_kernel(attn_ref, x0_ref, x1_ref, x2_ref, out_ref):
    # attn_ref: (HEIGHT, BC_TILE, 1) f32  (VMEM-resident across spatial tiles)
    # x*_ref / out_ref: (BC_TILE, S_TILE)
    a = attn_ref[...]
    acc = x0_ref[...].astype(jnp.float32) * a[0]
    acc = acc + x1_ref[...].astype(jnp.float32) * a[1]
    acc = acc + x2_ref[...].astype(jnp.float32) * a[2]
    out_ref[...] = acc.astype(out_ref.dtype)


def eau_forward(inp_feats, lumi_feats, weights, biases):
    """inp_feats: list of HEIGHT arrays (B, C, H, W); lumi_feats: list of (B, 1024).
    weights[i]: (1024, C), biases[i]: (C,). Returns (B, C, H, W)."""
    assert len(inp_feats) == HEIGHT and len(lumi_feats) == HEIGHT
    B, C, H, W = inp_feats[0].shape
    S = H * W
    BC = B * C
    dtype = inp_feats[0].dtype
    itemsize = jnp.dtype(dtype).itemsize

    # ---- 1) one-time attention prologue: (HEIGHT, B, C) f32
    b2d = [b.reshape(1, C) for b in biases]
    attn = pl.pallas_call(
        eau_attn_kernel,
        out_shape=jax.ShapeDtypeStruct((HEIGHT, B, C), jnp.float32),
    )(
        lumi_feats[0], lumi_feats[1], lumi_feats[2],
        weights[0], weights[1], weights[2],
        b2d[0], b2d[1], b2d[2],
    )
    attn_bc = attn.reshape(HEIGHT, BC, 1)  # tiny one-time relayout

    # ---- 2) streaming weighted sum over (B*C, S), tiled + double-buffered.
    # No host-side padding: pl.cdiv grid + masked partial edge blocks.
    xs = [x.reshape(BC, S) for x in inp_feats]  # metadata-only reshape

    # Large tiles to amortize per-grid-step overhead; cap total pipeline VMEM
    # at ~16 MiB (4 streams x 2 buffers x 2 MiB) -> fits under the 32 MiB
    # limit we request below on all of v5e/v6e/v7x.
    S_TILE = min(_round_up(S, 128), 2048)          # lane-dense, multiple of 128
    BC_TILE = min(_round_up(BC, _sublane(dtype)), 256)

    n_bc = pl.cdiv(BC, BC_TILE)
    n_s = pl.cdiv(S, S_TILE)

    if n_bc >= n_s:
        grid = (n_bc, n_s)
        x_map = lambda i, j: (i, j)
        attn_map = lambda i, j: (0, i, 0)   # independent of inner axis -> resident
    else:
        # Put the spatial axis outermost so megacore sharding has >1 step to
        # split even when B*C fits in a single tile.
        grid = (n_s, n_bc)
        x_map = lambda j, i: (i, j)
        attn_map = lambda j, i: (0, i, 0)

    x_spec = pl.BlockSpec((BC_TILE, S_TILE), x_map)

    cost = pl.CostEstimate(
        flops=5 * BC * S,                                   # 3 mul + 2 add / elem
        transcendentals=0,
        bytes_accessed=4 * BC * S * itemsize + HEIGHT * BC * 4,
    )

    out = pl.pallas_call(
        eau_weighted_sum_kernel,
        out_shape=jax.ShapeDtypeStruct((BC, S), dtype),
        grid_spec=pl.GridSpec(
            grid=grid,
            in_specs=[
                pl.BlockSpec((HEIGHT, BC_TILE, 1), attn_map),
                x_spec, x_spec, x_spec,
            ],
            out_specs=pl.BlockSpec((BC_TILE, S_TILE), x_map),
        ),
        compiler_params=pltpu.CompilerParams(
            dimension_semantics=("parallel", "parallel"),
            vmem_limit_bytes=32 * 1024 * 1024,
        ),
        cost_estimate=cost,
    )(attn_bc, xs[0], xs[1], xs[2])

    return out.reshape(B, C, H, W)


def eau_reference(inp_feats, lumi_feats, weights, biases):
    """Plain-JAX reference matching the PyTorch forward."""
    inp = jnp.stack(inp_feats, axis=1)                                   # (B,3,C,H,W)
    logits = jnp.stack(
        [lumi_feats[i] @ weights[i] + biases[i] for i in range(HEIGHT)], axis=1
    )                                                                    # (B,3,C)
    attn = jax.nn.softmax(logits, axis=1)[..., None, None]               # (B,3,C,1,1)
    return jnp.sum(inp * attn, axis=1)                                   # (B,C,H,W)


if __name__ == "__main__":
    # Small but multi-tile along the spatial axis with a partial edge block:
    # S = 48*48 = 2304 -> 2 spatial tiles of 2048 (second one partially masked).
    B, C, H, W = 2, 16, 48, 48
    key = jax.random.PRNGKey(0)
    keys = jax.random.split(key, 4 * HEIGHT)

    inp_feats = [
        jax.random.normal(keys[i], (B, C, H, W), jnp.float32) for i in range(HEIGHT)
    ]
    lumi_feats = [
        jax.random.normal(keys[HEIGHT + i], (B, LUMI_DIM), jnp.float32)
        for i in range(HEIGHT)
    ]
    # deterministic synthetic Linear(1024 -> C) parameters
    weights = [
        0.02 * jax.random.normal(keys[2 * HEIGHT + i], (LUMI_DIM, C), jnp.float32)
        for i in range(HEIGHT)
    ]
    biases = [
        0.1 * jax.random.normal(keys[3 * HEIGHT + i], (C,), jnp.float32)
        for i in range(HEIGHT)
    ]

    out = eau_forward(inp_feats, lumi_feats, weights, biases)
    out = jax.block_until_ready(out)

    ref = eau_reference(inp_feats, lumi_feats, weights, biases)
    assert out.shape == (B, C, H, W)
    assert jnp.allclose(out, ref, atol=1e-4, rtol=1e-4), "mismatch vs reference"

    print("KERNEL_OK")
</pallas_src>

<mosaic_0001>
module attributes {stable_mosaic.version = 11 : i64} {
  func.func @eau_attn_kernel(%arg0: memref<2x1024xf32, #tpu.memory_space<vmem>>, %arg1: memref<2x1024xf32, #tpu.memory_space<vmem>>, %arg2: memref<2x1024xf32, #tpu.memory_space<vmem>>, %arg3: memref<1024x16xf32, #tpu.memory_space<vmem>>, %arg4: memref<1024x16xf32, #tpu.memory_space<vmem>>, %arg5: memref<1024x16xf32, #tpu.memory_space<vmem>>, %arg6: memref<1x16xf32, #tpu.memory_space<vmem>>, %arg7: memref<1x16xf32, #tpu.memory_space<vmem>>, %arg8: memref<1x16xf32, #tpu.memory_space<vmem>>, %arg9: memref<3x2x16xf32, #tpu.memory_space<vmem>>) attributes {dimension_semantics = [], scalar_prefetch = 0 : i64, scratch_operands = 0 : i64, tpu.core_type = #tpu.core_type<tc>} {
    %c0 = arith.constant 0 : index
    %c0_0 = arith.constant 0 : index
    %0 = vector.load %arg0[%c0, %c0_0] : memref<2x1024xf32, #tpu.memory_space<vmem>>, vector<2x1024xf32>
    %c0_1 = arith.constant 0 : index
    %c0_2 = arith.constant 0 : index
    %1 = vector.load %arg3[%c0_1, %c0_2] : memref<1024x16xf32, #tpu.memory_space<vmem>>, vector<1024x16xf32>
    %cst = arith.constant dense<0.000000e+00> : vector<2x16xf32>
    %2 = tpu.matmul %0, %1, %cst {dimension_numbers = #tpu.dot_dimension_numbers<[1], [0], [0], [1], [0, 0, 1, 1], [], []>} : vector<2x1024xf32>, vector<1024x16xf32>, vector<2x16xf32> -> vector<2x16xf32>
    %c0_3 = arith.constant 0 : index
    %c0_4 = arith.constant 0 : index
    %3 = vector.load %arg6[%c0_3, %c0_4] : memref<1x16xf32, #tpu.memory_space<vmem>>, vector<1x16xf32>
    %4 = vector.broadcast %3 : vector<1x16xf32> to vector<2x16xf32>
    %5 = arith.addf %2, %4 : vector<2x16xf32>
    %c0_5 = arith.constant 0 : index
    %c0_6 = arith.constant 0 : index
    %6 = vector.load %arg1[%c0_5, %c0_6] : memref<2x1024xf32, #tpu.memory_space<vmem>>, vector<2x1024xf32>
    %c0_7 = arith.constant 0 : index
    %c0_8 = arith.constant 0 : index
    %7 = vector.load %arg4[%c0_7, %c0_8] : memref<1024x16xf32, #tpu.memory_space<vmem>>, vector<1024x16xf32>
    %cst_9 = arith.constant dense<0.000000e+00> : vector<2x16xf32>
    %8 = tpu.matmul %6, %7, %cst_9 {dimension_numbers = #tpu.dot_dimension_numbers<[1], [0], [0], [1], [0, 0, 1, 1], [], []>} : vector<2x1024xf32>, vector<1024x16xf32>, vector<2x16xf32> -> vector<2x16xf32>
    %c0_10 = arith.constant 0 : index
    %c0_11 = arith.constant 0 : index
    %9 = vector.load %arg7[%c0_10, %c0_11] : memref<1x16xf32, #tpu.memory_space<vmem>>, vector<1x16xf32>
    %10 = vector.broadcast %9 : vector<1x16xf32> to vector<2x16xf32>
    %11 = arith.addf %8, %10 : vector<2x16xf32>
    %c0_12 = arith.constant 0 : index
    %c0_13 = arith.constant 0 : index
    %12 = vector.load %arg2[%c0_12, %c0_13] : memref<2x1024xf32, #tpu.memory_space<vmem>>, vector<2x1024xf32>
    %c0_14 = arith.constant 0 : index
    %c0_15 = arith.constant 0 : index
    %13 = vector.load %arg5[%c0_14, %c0_15] : memref<1024x16xf32, #tpu.memory_space<vmem>>, vector<1024x16xf32>
    %cst_16 = arith.constant dense<0.000000e+00> : vector<2x16xf32>
    %14 = tpu.matmul %12, %13, %cst_16 {dimension_numbers = #tpu.dot_dimension_numbers<[1], [0], [0], [1], [0, 0, 1, 1], [], []>} : vector<2x1024xf32>, vector<1024x16xf32>, vector<2x16xf32> -> vector<2x16xf32>
    %c0_17 = arith.constant 0 : index
    %c0_18 = arith.constant 0 : index
    %15 = vector.load %arg8[%c0_17, %c0_18] : memref<1x16xf32, #tpu.memory_space<vmem>>, vector<1x16xf32>
    %16 = vector.broadcast %15 : vector<1x16xf32> to vector<2x16xf32>
    %17 = arith.addf %14, %16 : vector<2x16xf32>
    %18 = vector.shape_cast %5 : vector<2x16xf32> to vector<1x2x16xf32>
    %19 = vector.shape_cast %11 : vector<2x16xf32> to vector<1x2x16xf32>
    %20 = vector.shape_cast %17 : vector<2x16xf32> to vector<1x2x16xf32>
    %21 = tpu.concatenate %18, %19, %20 in 0 : vector<1x2x16xf32>, vector<1x2x16xf32>, vector<1x2x16xf32> -> vector<3x2x16xf32>
    %cst_19 = arith.constant dense<0xFF800000> : vector<2x16xf32>
    %22 = vector.multi_reduction <maximumf>, %21, %cst_19 [0] : vector<3x2x16xf32> to vector<2x16xf32>
    %23 = vector.shape_cast %22 : vector<2x16xf32> to vector<1x2x16xf32>
    %24 = vector.broadcast %23 : vector<1x2x16xf32> to vector<3x2x16xf32>
    %25 = arith.subf %21, %24 : vector<3x2x16xf32>
    %26 = math.exp %25 : vector<3x2x16xf32>
    %cst_20 = arith.constant dense<0.000000e+00> : vector<2x16xf32>
    %27 = vector.multi_reduction <add>, %26, %cst_20 [0] : vector<3x2x16xf32> to vector<2x16xf32>
    %28 = vector.shape_cast %27 : vector<2x16xf32> to vector<1x2x16xf32>
    %29 = vector.broadcast %28 : vector<1x2x16xf32> to vector<3x2x16xf32>
    %30 = arith.divf %26, %29 : vector<3x2x16xf32>
    %c0_21 = arith.constant 0 : index
    %c0_22 = arith.constant 0 : index
    %c0_23 = arith.constant 0 : index
    %31 = vector.load %arg9[%c0_21, %c0_22, %c0_23] : memref<3x2x16xf32, #tpu.memory_space<vmem>>, vector<3x2x16xf32>
    tpu.vector_store %arg9[%c0_21, %c0_22, %c0_23], %30 {strides = array<i32>} : memref<3x2x16xf32, #tpu.memory_space<vmem>>, vector<3x2x16xf32>,
    return
  }
}

</mosaic_0001>

<llo_original>
// kernel: tpu_custom_call.1
$region0: #{tpu_custom_call.1}
  #allocation0 [shape = 'u32[]', space=smem, size = 0x4, offset = 0x4, fixed_abs, tag = 'smem constant byte address 0x4 - core index']
  #allocation1 [shape = 'u32[72,128]{1,0:T(1,128)}', space=vmem, size = 0x9000, scoped, tag = 'internal scratch']
  %s0 = inlined_call_operand.vmem [shape: f32[2,1024], index: 0, kind: input, shape index: {}]
  %s1 = inlined_call_operand.vmem [shape: f32[2,1024], index: 1, kind: input, shape index: {}]
  %s2 = inlined_call_operand.vmem [shape: f32[2,1024], index: 2, kind: input, shape index: {}]
  %s3 = inlined_call_operand.vmem [shape: f32[1024,16], index: 3, kind: input, shape index: {}]
  %s4 = inlined_call_operand.vmem [shape: f32[1024,16], index: 4, kind: input, shape index: {}]
  %s5 = inlined_call_operand.vmem [shape: f32[1024,16], index: 5, kind: input, shape index: {}]
  %s6 = inlined_call_operand.vmem [shape: f32[1,16], index: 6, kind: input, shape index: {}]
  %s7 = inlined_call_operand.vmem [shape: f32[1,16], index: 7, kind: input, shape index: {}]
  %s8 = inlined_call_operand.vmem [shape: f32[1,16], index: 8, kind: input, shape index: {}]
  %s9 = inlined_call_operand.hbm [shape: f32[3,2,16], index: 9, kind: output, shape index: {}]
  %s10 = sld [smem:[#allocation0]]
  $region46: #{tpu_custom_call.1} parent=0
    _
  %s12 = ssub.s32 1, %s10
  %s13 = scalar_select 0, %s12, %s10
  $region1: #{tpu_custom_call.1} parent=0
    #allocation2 [shape = 'u8[3072]{0}', space=vmem, size = 0xc00, scoped, tag = 'output window, operand 0, single buffered']
    #allocation3 [shape = 's32[1]{0}', space=sflag, size = 0x4, scoped, tag = 'scoped memory for tpu_custom_call.1']
    %14 = vsyncpa [#allocation3], 0
    // Predicated region
    $region2: #{tpu_custom_call.1} parent=1 // pred_check
      _
    $region3: #{tpu_custom_call.1} parent=1 // pred_check_branch
      %16 = sbr.rel (0) target = $region5
    $region4: #{tpu_custom_call.1} parent=1 // pred_region
      _
    $region5: #{tpu_custom_call.1} parent=1 // pred_fallthru
      _
    // Predicated region
    $region6: #{tpu_custom_call.1} parent=1 // pred_check
      _
    $region7: #{tpu_custom_call.1} parent=1 // pred_check_branch
      %18 = sbr.rel (0) target = $region9
    $region8: #{tpu_custom_call.1} parent=1 // pred_region
      _
    $region9: #{tpu_custom_call.1} parent=1 // pred_fallthru
      _
    // Predicated region
    $region10: #{tpu_custom_call.1} parent=1 // pred_check
      _
    $region11: #{tpu_custom_call.1} parent=1 // pred_check_branch
      %20 = sbr.rel (0) target = $region13
    $region12: #{tpu_custom_call.1} parent=1 // pred_region
      _
    $region13: #{tpu_custom_call.1} parent=1 // pred_fallthru
      _
    // Predicated region
    $region14: #{tpu_custom_call.1} parent=1 // pred_check
      _
    $region15: #{tpu_custom_call.1} parent=1 // pred_check_branch
      %22 = sbr.rel (0) target = $region17
    $region16: #{tpu_custom_call.1} parent=1 // pred_region
      _
    $region17: #{tpu_custom_call.1} parent=1 // pred_fallthru
      _
    // Predicated region
    $region18: #{tpu_custom_call.1} parent=1 // pred_check
      _
    $region19: #{tpu_custom_call.1} parent=1 // pred_check_branch
      %24 = sbr.rel (0) target = $region21
    $region20: #{tpu_custom_call.1} parent=1 // pred_region
      _
    $region21: #{tpu_custom_call.1} parent=1 // pred_fallthru
      _
    // Predicated region
    $region22: #{tpu_custom_call.1} parent=1 // pred_check
      _
    $region23: #{tpu_custom_call.1} parent=1 // pred_check_branch
      %26 = sbr.rel (0) target = $region25
    $region24: #{tpu_custom_call.1} parent=1 // pred_region
      _
    $region25: #{tpu_custom_call.1} parent=1 // pred_fallthru
      _
    // Predicated region
    $region26: #{tpu_custom_call.1} parent=1 // pred_check
      _
    $region27: #{tpu_custom_call.1} parent=1 // pred_check_branch
      %28 = sbr.rel (0) target = $region29
    $region28: #{tpu_custom_call.1} parent=1 // pred_region
      _
    $region29: #{tpu_custom_call.1} parent=1 // pred_fallthru
      _
    // Predicated region
    $region30: #{tpu_custom_call.1} parent=1 // pred_check
      _
    $region31: #{tpu_custom_call.1} parent=1 // pred_check_branch
      %30 = sbr.rel (0) target = $region33
    $region32: #{tpu_custom_call.1} parent=1 // pred_region
      _
    $region33: #{tpu_custom_call.1} parent=1 // pred_fallthru
      _
    // Predicated region
    $region34: #{tpu_custom_call.1} parent=1 // pred_check
      _
    $region35: #{tpu_custom_call.1} parent=1 // pred_check_branch
      %32 = sbr.rel (0) target = $region37
    $region36: #{tpu_custom_call.1} parent=1 // pred_region
      _
    $region37: #{tpu_custom_call.1} parent=1 // pred_fallthru
      _
    %v33 = vld [vmem:[%s0] sm:$0xff]
    %v34 = vld [vmem:[%s0 + $0x8] sm:$0xff]
    %v35 = vld [vmem:[%s3] sm:$0xff]
    %v36 = vld [vmem:[%s3 + $0x8] sm:$0xff]
    %v37 = vld [vmem:[%s3 + $0x10] sm:$0xff]
    %v38 = vld [vmem:[%s3 + $0x18] sm:$0xff]
    %v39 = vld [vmem:[%s3 + $0x20] sm:$0xff]
    %v40 = vld [vmem:[%s3 + $0x28] sm:$0xff]
    %v41 = vld [vmem:[%s3 + $0x30] sm:$0xff]
    %v42 = vld [vmem:[%s3 + $0x38] sm:$0xff]
    %v43 = vld [vmem:[%s3 + $0x40] sm:$0xff]
    %v44 = vld [vmem:[%s3 + $0x48] sm:$0xff]
    %v45 = vld [vmem:[%s3 + $0x50] sm:$0xff]
    %v46 = vld [vmem:[%s3 + $0x58] sm:$0xff]
    %v47 = vld [vmem:[%s3 + $0x60] sm:$0xff]
    %v48 = vld [vmem:[%s3 + $0x68] sm:$0xff]
    %v49 = vld [vmem:[%s3 + $0x70] sm:$0xff]
    %v50 = vld [vmem:[%s3 + $0x78] sm:$0xff]
    %v51 = vld [vmem:[%s3 + $0x80] sm:$0xff]
    %v52 = vld [vmem:[%s3 + $0x88] sm:$0xff]
    %v53 = vld [vmem:[%s3 + $0x90] sm:$0xff]
    %v54 = vld [vmem:[%s3 + $0x98] sm:$0xff]
    %v55 = vld [vmem:[%s3 + $0xa0] sm:$0xff]
    %v56 = vld [vmem:[%s3 + $0xa8] sm:$0xff]
    %v57 = vld [vmem:[%s3 + $0xb0] sm:$0xff]
    %v58 = vld [vmem:[%s3 + $0xb8] sm:$0xff]
    %v59 = vld [vmem:[%s3 + $0xc0] sm:$0xff]
    %v60 = vld [vmem:[%s3 + $0xc8] sm:$0xff]
    %v61 = vld [vmem:[%s3 + $0xd0] sm:$0xff]
    %v62 = vld [vmem:[%s3 + $0xd8] sm:$0xff]
    %v63 = vld [vmem:[%s3 + $0xe0] sm:$0xff]
    %v64 = vld [vmem:[%s3 + $0xe8] sm:$0xff]
    %v65 = vld [vmem:[%s3 + $0xf0] sm:$0xff]
    %v66 = vld [vmem:[%s3 + $0xf8] sm:$0xff]
    %v67 = vld [vmem:[%s3 + $0x100] sm:$0xff]
    %v68 = vld [vmem:[%s3 + $0x108] sm:$0xff]
    %v69 = vld [vmem:[%s3 + $0x110] sm:$0xff]
    %v70 = vld [vmem:[%s3 + $0x118] sm:$0xff]
    %v71 = vld [vmem:[%s3 + $0x120] sm:$0xff]
    %v72 = vld [vmem:[%s3 + $0x128] sm:$0xff]
    %v73 = vld [vmem:[%s3 + $0x130] sm:$0xff]
    %v74 = vld [vmem:[%s3 + $0x138] sm:$0xff]
    %v75 = vld [vmem:[%s3 + $0x140] sm:$0xff]
    %v76 = vld [vmem:[%s3 + $0x148] sm:$0xff]
    %v77 = vld [vmem:[%s3 + $0x150] sm:$0xff]
    %v78 = vld [vmem:[%s3 + $0x158] sm:$0xff]
    %v79 = vld [vmem:[%s3 + $0x160] sm:$0xff]
    %v80 = vld [vmem:[%s3 + $0x168] sm:$0xff]
    %v81 = vld [vmem:[%s3 + $0x170] sm:$0xff]
    %v82 = vld [vmem:[%s3 + $0x178] sm:$0xff]
    %v83 = vld [vmem:[%s3 + $0x180] sm:$0xff]
    %v84 = vld [vmem:[%s3 + $0x188] sm:$0xff]
    %v85 = vld [vmem:[%s3 + $0x190] sm:$0xff]
    %v86 = vld [vmem:[%s3 + $0x198] sm:$0xff]
    %v87 = vld [vmem:[%s3 + $0x1a0] sm:$0xff]
    %v88 = vld [vmem:[%s3 + $0x1a8] sm:$0xff]
    %v89 = vld [vmem:[%s3 + $0x1b0] sm:$0xff]
    %v90 = vld [vmem:[%s3 + $0x1b8] sm:$0xff]
    %v91 = vld [vmem:[%s3 + $0x1c0] sm:$0xff]
    %v92 = vld [vmem:[%s3 + $0x1c8] sm:$0xff]
    %v93 = vld [vmem:[%s3 + $0x1d0] sm:$0xff]
    %v94 = vld [vmem:[%s3 + $0x1d8] sm:$0xff]
    %v95 = vld [vmem:[%s3 + $0x1e0] sm:$0xff]
    %v96 = vld [vmem:[%s3 + $0x1e8] sm:$0xff]
    %v97 = vld [vmem:[%s3 + $0x1f0] sm:$0xff]
    %v98 = vld [vmem:[%s3 + $0x1f8] sm:$0xff]
    %v99 = vld [vmem:[%s3 + $0x200] sm:$0xff]
    %v100 = vld [vmem:[%s3 + $0x208] sm:$0xff]
    %v101 = vld [vmem:[%s3 + $0x210] sm:$0xff]
    %v102 = vld [vmem:[%s3 + $0x218] sm:$0xff]
    %v103 = vld [vmem:[%s3 + $0x220] sm:$0xff]
    %v104 = vld [vmem:[%s3 + $0x228] sm:$0xff]
    %v105 = vld [vmem:[%s3 + $0x230] sm:$0xff]
    %v106 = vld [vmem:[%s3 + $0x238] sm:$0xff]
    %v107 = vld [vmem:[%s3 + $0x240] sm:$0xff]
    %v108 = vld [vmem:[%s3 + $0x248] sm:$0xff]
    %v109 = vld [vmem:[%s3 + $0x250] sm:$0xff]
    %v110 = vld [vmem:[%s3 + $0x258] sm:$0xff]
    %v111 = vld [vmem:[%s3 + $0x260] sm:$0xff]
    %v112 = vld [vmem:[%s3 + $0x268] sm:$0xff]
    %v113 = vld [vmem:[%s3 + $0x270] sm:$0xff]
    %v114 = vld [vmem:[%s3 + $0x278] sm:$0xff]
    %v115 = vld [vmem:[%s3 + $0x280] sm:$0xff]
    %v116 = vld [vmem:[%s3 + $0x288] sm:$0xff]
    %v117 = vld [vmem:[%s3 + $0x290] sm:$0xff]
    %v118 = vld [vmem:[%s3 + $0x298] sm:$0xff]
    %v119 = vld [vmem:[%s3 + $0x2a0] sm:$0xff]
    %v120 = vld [vmem:[%s3 + $0x2a8] sm:$0xff]
    %v121 = vld [vmem:[%s3 + $0x2b0] sm:$0xff]
    %v122 = vld [vmem:[%s3 + $0x2b8] sm:$0xff]
    %v123 = vld [vmem:[%s3 + $0x2c0] sm:$0xff]
    %v124 = vld [vmem:[%s3 + $0x2c8] sm:$0xff]
    %v125 = vld [vmem:[%s3 + $0x2d0] sm:$0xff]
    %v126 = vld [vmem:[%s3 + $0x2d8] sm:$0xff]
    %v127 = vld [vmem:[%s3 + $0x2e0] sm:$0xff]
    %v128 = vld [vmem:[%s3 + $0x2e8] sm:$0xff]
    %v129 = vld [vmem:[%s3 + $0x2f0] sm:$0xff]
    %v130 = vld [vmem:[%s3 + $0x2f8] sm:$0xff]
    %v131 = vld [vmem:[%s3 + $0x300] sm:$0xff]
    %v132 = vld [vmem:[%s3 + $0x308] sm:$0xff]
    %v133 = vld [vmem:[%s3 + $0x310] sm:$0xff]
    %v134 = vld [vmem:[%s3 + $0x318] sm:$0xff]
    %v135 = vld [vmem:[%s3 + $0x320] sm:$0xff]
    %v136 = vld [vmem:[%s3 + $0x328] sm:$0xff]
    %v137 = vld [vmem:[%s3 + $0x330] sm:$0xff]
    %v138 = vld [vmem:[%s3 + $0x338] sm:$0xff]
    %v139 = vld [vmem:[%s3 + $0x340] sm:$0xff]
    %v140 = vld [vmem:[%s3 + $0x348] sm:$0xff]
    %v141 = vld [vmem:[%s3 + $0x350] sm:$0xff]
    %v142 = vld [vmem:[%s3 + $0x358] sm:$0xff]
    %v143 = vld [vmem:[%s3 + $0x360] sm:$0xff]
    %v144 = vld [vmem:[%s3 + $0x368] sm:$0xff]
    %v145 = vld [vmem:[%s3 + $0x370] sm:$0xff]
    %v146 = vld [vmem:[%s3 + $0x378] sm:$0xff]
    %v147 = vld [vmem:[%s3 + $0x380] sm:$0xff]
    %v148 = vld [vmem:[%s3 + $0x388] sm:$0xff]
    %v149 = vld [vmem:[%s3 + $0x390] sm:$0xff]
    %v150 = vld [vmem:[%s3 + $0x398] sm:$0xff]
    %v151 = vld [vmem:[%s3 + $0x3a0] sm:$0xff]
    %v152 = vld [vmem:[%s3 + $0x3a8] sm:$0xff]
    %v153 = vld [vmem:[%s3 + $0x3b0] sm:$0xff]
    %v154 = vld [vmem:[%s3 + $0x3b8] sm:$0xff]
    %v155 = vld [vmem:[%s3 + $0x3c0] sm:$0xff]
    %v156 = vld [vmem:[%s3 + $0x3c8] sm:$0xff]
    %v157 = vld [vmem:[%s3 + $0x3d0] sm:$0xff]
    %v158 = vld [vmem:[%s3 + $0x3d8] sm:$0xff]
    %v159 = vld [vmem:[%s3 + $0x3e0] sm:$0xff]
    %v160 = vld [vmem:[%s3 + $0x3e8] sm:$0xff]
    %v161 = vld [vmem:[%s3 + $0x3f0] sm:$0xff]
    %v162 = vld [vmem:[%s3 + $0x3f8] sm:$0xff]
    %v163 = vld [vmem:[%s6] sm:$0x1]
    %v165 = vperm.slane %v163, 0
    %169 = vst [vmem:[#allocation1] ss:$4 sm:$0xff] %v33
    %s170 = scalar_lea.vmem [#allocation1], 32
    %171 = vst [vmem:[%s170] ss:$4 sm:$0xff] %v34
    %v172 = vld.sshfl [vmem:[#allocation1] sm:$0xff pattern:$0x73625140]
    %v173 = vld.sshfl [vmem:[#allocation1 + $0x8] sm:$0xff pattern:$0x73625140]
    %v174 = vld.sshfl [vmem:[#allocation1 + $0x10] sm:$0xff pattern:$0x73625140]
    %v175 = vld.sshfl [vmem:[#allocation1 + $0x18] sm:$0xff pattern:$0x73625140]
    %v176 = vld.sshfl [vmem:[#allocation1 + $0x20] sm:$0xff pattern:$0x73625140]
    %v177 = vld.sshfl [vmem:[#allocation1 + $0x28] sm:$0xff pattern:$0x73625140]
    %v178 = vld.sshfl [vmem:[#allocation1 + $0x30] sm:$0xff pattern:$0x73625140]
    %v179 = vld.sshfl [vmem:[#allocation1 + $0x38] sm:$0xff pattern:$0x73625140]
    %188 = vmatpush.msra.mxu0 %v50
    %189 = vmatpush.msra.mxu0 %v49
    %190 = vmatpush.msra.mxu0 %v48
    %191 = vmatpush.msra.mxu0 %v47
    %192 = vmatpush.msra.mxu0 %v46
    %193 = vmatpush.msra.mxu0 %v45
    %194 = vmatpush.msra.mxu0 %v44
    %195 = vmatpush.msra.mxu0 %v43
    %196 = vmatpush.msra.mxu0 %v42
    %197 = vmatpush.msra.mxu0 %v41
    %198 = vmatpush.msra.mxu0 %v40
    %199 = vmatpush.msra.mxu0 %v39
    %200 = vmatpush.msra.mxu0 %v38
    %201 = vmatpush.msra.mxu0 %v37
    %202 = vmatpush.msra.mxu0 %v36
    %203 = vmatpush.msra.mxu0 %v35
    %204 = vmatmul.f32.gmra.mxu0 %v172
    %v205 = vpop.f32.mrf.mxu0
    %v206 = vadd.f32 %v165, %v205
    %207 = vdwg.mxu0
    %208 = vmatpush.msra.mxu0 %v66
    %209 = vmatpush.msra.mxu0 %v65
    %210 = vmatpush.msra.mxu0 %v64
    %211 = vmatpush.msra.mxu0 %v63
    %212 = vmatpush.msra.mxu0 %v62
    %213 = vmatpush.msra.mxu0 %v61
    %214 = vmatpush.msra.mxu0 %v60
    %215 = vmatpush.msra.mxu0 %v59
    %216 = vmatpush.msra.mxu0 %v58
    %217 = vmatpush.msra.mxu0 %v57
    %218 = vmatpush.msra.mxu0 %v56
    %219 = vmatpush.msra.mxu0 %v55
    %220 = vmatpush.msra.mxu0 %v54
    %221 = vmatpush.msra.mxu0 %v53
    %222 = vmatpush.msra.mxu0 %v52
    %223 = vmatpush.msra.mxu0 %v51
    %224 = vmatmul.f32.gmra.mxu0 %v173
    %v225 = vpop.f32.mrf.mxu0
    %v226 = vadd.f32 %v206, %v225
    %227 = vdwg.mxu0
    %228 = vmatpush.msra.mxu0 %v82
    %229 = vmatpush.msra.mxu0 %v81
    %230 = vmatpush.msra.mxu0 %v80
    %231 = vmatpush.msra.mxu0 %v79
    %232 = vmatpush.msra.mxu0 %v78
    %233 = vmatpush.msra.mxu0 %v77
    %234 = vmatpush.msra.mxu0 %v76
    %235 = vmatpush.msra.mxu0 %v75
    %236 = vmatpush.msra.mxu0 %v74
    %237 = vmatpush.msra.mxu0 %v73
    %238 = vmatpush.msra.mxu0 %v72
    %239 = vmatpush.msra.mxu0 %v71
    %240 = vmatpush.msra.mxu0 %v70
    %241 = vmatpush.msra.mxu0 %v69
    %242 = vmatpush.msra.mxu0 %v68
    %243 = vmatpush.msra.mxu0 %v67
    %244 = vmatmul.f32.gmra.mxu0 %v174
    %v245 = vpop.f32.mrf.mxu0
    %v246 = vadd.f32 %v226, %v245
    %247 = vdwg.mxu0
    %248 = vmatpush.msra.mxu0 %v98
    %249 = vmatpush.msra.mxu0 %v97
    %250 = vmatpush.msra.mxu0 %v96
    %251 = vmatpush.msra.mxu0 %v95
    %252 = vmatpush.msra.mxu0 %v94
    %253 = vmatpush.msra.mxu0 %v93
    %254 = vmatpush.msra.mxu0 %v92
    %255 = vmatpush.msra.mxu0 %v91
    %256 = vmatpush.msra.mxu0 %v90
    %257 = vmatpush.msra.mxu0 %v89
    %258 = vmatpush.msra.mxu0 %v88
    %259 = vmatpush.msra.mxu0 %v87
    %260 = vmatpush.msra.mxu0 %v86
    %261 = vmatpush.msra.mxu0 %v85
    %262 = vmatpush.msra.mxu0 %v84
    %263 = vmatpush.msra.mxu0 %v83
    %264 = vmatmul.f32.gmra.mxu0 %v175
    %v265 = vpop.f32.mrf.mxu0
    %v266 = vadd.f32 %v246, %v265
    %267 = vdwg.mxu0
    %268 = vmatpush.msra.mxu0 %v114
    %269 = vmatpush.msra.mxu0 %v113
    %270 = vmatpush.msra.mxu0 %v112
    %271 = vmatpush.msra.mxu0 %v111
    %272 = vmatpush.msra.mxu0 %v110
    %273 = vmatpush.msra.mxu0 %v109
    %274 = vmatpush.msra.mxu0 %v108
    %275 = vmatpush.msra.mxu0 %v107
    %276 = vmatpush.msra.mxu0 %v106
    %277 = vmatpush.msra.mxu0 %v105
    %278 = vmatpush.msra.mxu0 %v104
    %279 = vmatpush.msra.mxu0 %v103
    %280 = vmatpush.msra.mxu0 %v102
    %281 = vmatpush.msra.mxu0 %v101
    %282 = vmatpush.msra.mxu0 %v100
    %283 = vmatpush.msra.mxu0 %v99
    %284 = vmatmul.f32.gmra.mxu0 %v176
    %v285 = vpop.f32.mrf.mxu0
    %v286 = vadd.f32 %v266, %v285
    %287 = vdwg.mxu0
    %288 = vmatpush.msra.mxu0 %v130
    %289 = vmatpush.msra.mxu0 %v129
    %290 = vmatpush.msra.mxu0 %v128
    %291 = vmatpush.msra.mxu0 %v127
    %292 = vmatpush.msra.mxu0 %v126
    %293 = vmatpush.msra.mxu0 %v125
    %294 = vmatpush.msra.mxu0 %v124
    %295 = vmatpush.msra.mxu0 %v123
    %296 = vmatpush.msra.mxu0 %v122
    %297 = vmatpush.msra.mxu0 %v121
    %298 = vmatpush.msra.mxu0 %v120
    %299 = vmatpush.msra.mxu0 %v119
    %300 = vmatpush.msra.mxu0 %v118
    %301 = vmatpush.msra.mxu0 %v117
    %302 = vmatpush.msra.mxu0 %v116
    %303 = vmatpush.msra.mxu0 %v115
    %304 = vmatmul.f32.gmra.mxu0 %v177
    %v305 = vpop.f32.mrf.mxu0
    %v306 = vadd.f32 %v286, %v305
    %307 = vdwg.mxu0
    %308 = vmatpush.msra.mxu0 %v146
    %309 = vmatpush.msra.mxu0 %v145
    %310 = vmatpush.msra.mxu0 %v144
    %311 = vmatpush.msra.mxu0 %v143
    %312 = vmatpush.msra.mxu0 %v142
    %313 = vmatpush.msra.mxu0 %v141
    %314 = vmatpush.msra.mxu0 %v140
    %315 = vmatpush.msra.mxu0 %v139
    %316 = vmatpush.msra.mxu0 %v138
    %317 = vmatpush.msra.mxu0 %v137
    %318 = vmatpush.msra.mxu0 %v136
    %319 = vmatpush.msra.mxu0 %v135
    %320 = vmatpush.msra.mxu0 %v134
    %321 = vmatpush.msra.mxu0 %v133
    %322 = vmatpush.msra.mxu0 %v132
    %323 = vmatpush.msra.mxu0 %v131
    %324 = vmatmul.f32.gmra.mxu0 %v178
    %v325 = vpop.f32.mrf.mxu0
    %v326 = vadd.f32 %v306, %v325
    %327 = vdwg.mxu0
    %328 = vmatpush.msra.mxu0 %v162
    %329 = vmatpush.msra.mxu0 %v161
    %330 = vmatpush.msra.mxu0 %v160
    %331 = vmatpush.msra.mxu0 %v159
    %332 = vmatpush.msra.mxu0 %v158
    %333 = vmatpush.msra.mxu0 %v157
    %334 = vmatpush.msra.mxu0 %v156
    %335 = vmatpush.msra.mxu0 %v155
    %336 = vmatpush.msra.mxu0 %v154
    %337 = vmatpush.msra.mxu0 %v153
    %338 = vmatpush.msra.mxu0 %v152
    %339 = vmatpush.msra.mxu0 %v151
    %340 = vmatpush.msra.mxu0 %v150
    %341 = vmatpush.msra.mxu0 %v149
    %342 = vmatpush.msra.mxu0 %v148
    %343 = vmatpush.msra.mxu0 %v147
    %344 = vmatmul.f32.gmra.mxu0 %v179
    %v345 = vpop.f32.mrf.mxu0
    %v346 = vadd.f32 %v326, %v345
    %347 = vdwg.mxu0
    %v348 = vld [vmem:[%s1] sm:$0xff]
    %v349 = vld [vmem:[%s1 + $0x8] sm:$0xff]
    %v350 = vld [vmem:[%s4] sm:$0xff]
    %v351 = vld [vmem:[%s4 + $0x8] sm:$0xff]
    %v352 = vld [vmem:[%s4 + $0x10] sm:$0xff]
    %v353 = vld [vmem:[%s4 + $0x18] sm:$0xff]
    %v354 = vld [vmem:[%s4 + $0x20] sm:$0xff]
    %v355 = vld [vmem:[%s4 + $0x28] sm:$0xff]
    %v356 = vld [vmem:[%s4 + $0x30] sm:$0xff]
    %v357 = vld [vmem:[%s4 + $0x38] sm:$0xff]
    %v358 = vld [vmem:[%s4 + $0x40] sm:$0xff]
    %v359 = vld [vmem:[%s4 + $0x48] sm:$0xff]
    %v360 = vld [vmem:[%s4 + $0x50] sm:$0xff]
    %v361 = vld [vmem:[%s4 + $0x58] sm:$0xff]
    %v362 = vld [vmem:[%s4 + $0x60] sm:$0xff]
    %v363 = vld [vmem:[%s4 + $0x68] sm:$0xff]
    %v364 = vld [vmem:[%s4 + $0x70] sm:$0xff]
    %v365 = vld [vmem:[%s4 + $0x78] sm:$0xff]
    %v366 = vld [vmem:[%s4 + $0x80] sm:$0xff]
    %v367 = vld [vmem:[%s4 + $0x88] sm:$0xff]
    %v368 = vld [vmem:[%s4 + $0x90] sm:$0xff]
    %v369 = vld [vmem:[%s4 + $0x98] sm:$0xff]
    %v370 = vld [vmem:[%s4 + $0xa0] sm:$0xff]
    %v371 = vld [vmem:[%s4 + $0xa8] sm:$0xff]
    %v372 = vld [vmem:[%s4 + $0xb0] sm:$0xff]
    %v373 = vld [vmem:[%s4 + $0xb8] sm:$0xff]
    %v374 = vld [vmem:[%s4 + $0xc0] sm:$0xff]
    %v375 = vld [vmem:[%s4 + $0xc8] sm:$0xff]
    %v376 = vld [vmem:[%s4 + $0xd0] sm:$0xff]
    %v377 = vld [vmem:[%s4 + $0xd8] sm:$0xff]
    %v378 = vld [vmem:[%s4 + $0xe0] sm:$0xff]
    %v379 = vld [vmem:[%s4 + $0xe8] sm:$0xff]
    %v380 = vld [vmem:[%s4 + $0xf0] sm:$0xff]
    %v381 = vld [vmem:[%s4 + $0xf8] sm:$0xff]
    %v382 = vld [vmem:[%s4 + $0x100] sm:$0xff]
    %v383 = vld [vmem:[%s4 + $0x108] sm:$0xff]
    %v384 = vld [vmem:[%s4 + $0x110] sm:$0xff]
    %v385 = vld [vmem:[%s4 + $0x118] sm:$0xff]
    %v386 = vld [vmem:[%s4 + $0x120] sm:$0xff]
    %v387 = vld [vmem:[%s4 + $0x128] sm:$0xff]
    %v388 = vld [vmem:[%s4 + $0x130] sm:$0xff]
    %v389 = vld [vmem:[%s4 + $0x138] sm:$0xff]
    %v390 = vld [vmem:[%s4 + $0x140] sm:$0xff]
    %v391 = vld [vmem:[%s4 + $0x148] sm:$0xff]
    %v392 = vld [vmem:[%s4 + $0x150] sm:$0xff]
    %v393 = vld [vmem:[%s4 + $0x158] sm:$0xff]
    %v394 = vld [vmem:[%s4 + $0x160] sm:$0xff]
    %v395 = vld [vmem:[%s4 + $0x168] sm:$0xff]
    %v396 = vld [vmem:[%s4 + $0x170] sm:$0xff]
    %v397 = vld [vmem:[%s4 + $0x178] sm:$0xff]
    %v398 = vld [vmem:[%s4 + $0x180] sm:$0xff]
    %v399 = vld [vmem:[%s4 + $0x188] sm:$0xff]
    %v400 = vld [vmem:[%s4 + $0x190] sm:$0xff]
    %v401 = vld [vmem:[%s4 + $0x198] sm:$0xff]
    %v402 = vld [vmem:[%s4 + $0x1a0] sm:$0xff]
    %v403 = vld [vmem:[%s4 + $0x1a8] sm:$0xff]
    %v404 = vld [vmem:[%s4 + $0x1b0] sm:$0xff]
    %v405 = vld [vmem:[%s4 + $0x1b8] sm:$0xff]
    %v406 = vld [vmem:[%s4 + $0x1c0] sm:$0xff]
    %v407 = vld [vmem:[%s4 + $0x1c8] sm:$0xff]
    %v408 = vld [vmem:[%s4 + $0x1d0] sm:$0xff]
    %v409 = vld [vmem:[%s4 + $0x1d8] sm:$0xff]
    %v410 = vld [vmem:[%s4 + $0x1e0] sm:$0xff]
    %v411 = vld [vmem:[%s4 + $0x1e8] sm:$0xff]
    %v412 = vld [vmem:[%s4 + $0x1f0] sm:$0xff]
    %v413 = vld [vmem:[%s4 + $0x1f8] sm:$0xff]
    %v414 = vld [vmem:[%s4 + $0x200] sm:$0xff]
    %v415 = vld [vmem:[%s4 + $0x208] sm:$0xff]
    %v416 = vld [vmem:[%s4 + $0x210] sm:$0xff]
    %v417 = vld [vmem:[%s4 + $0x218] sm:$0xff]
    %v418 = vld [vmem:[%s4 + $0x220] sm:$0xff]
    %v419 = vld [vmem:[%s4 + $0x228] sm:$0xff]
    %v420 = vld [vmem:[%s4 + $0x230] sm:$0xff]
    %v421 = vld [vmem:[%s4 + $0x238] sm:$0xff]
    %v422 = vld [vmem:[%s4 + $0x240] sm:$0xff]
    %v423 = vld [vmem:[%s4 + $0x248] sm:$0xff]
    %v424 = vld [vmem:[%s4 + $0x250] sm:$0xff]
    %v425 = vld [vmem:[%s4 + $0x258] sm:$0xff]
    %v426 = vld [vmem:[%s4 + $0x260] sm:$0xff]
    %v427 = vld [vmem:[%s4 + $0x268] sm:$0xff]
    %v428 = vld [vmem:[%s4 + $0x270] sm:$0xff]
    %v429 = vld [vmem:[%s4 + $0x278] sm:$0xff]
    %v430 = vld [vmem:[%s4 + $0x280] sm:$0xff]
    %v431 = vld [vmem:[%s4 + $0x288] sm:$0xff]
    %v432 = vld [vmem:[%s4 + $0x290] sm:$0xff]
    %v433 = vld [vmem:[%s4 + $0x298] sm:$0xff]
    %v434 = vld [vmem:[%s4 + $0x2a0] sm:$0xff]
    %v435 = vld [vmem:[%s4 + $0x2a8] sm:$0xff]
    %v436 = vld [vmem:[%s4 + $0x2b0] sm:$0xff]
    %v437 = vld [vmem:[%s4 + $0x2b8] sm:$0xff]
    %v438 = vld [vmem:[%s4 + $0x2c0] sm:$0xff]
    %v439 = vld [vmem:[%s4 + $0x2c8] sm:$0xff]
    %v440 = vld [vmem:[%s4 + $0x2d0] sm:$0xff]
    %v441 = vld [vmem:[%s4 + $0x2d8] sm:$0xff]
    %v442 = vld [vmem:[%s4 + $0x2e0] sm:$0xff]
    %v443 = vld [vmem:[%s4 + $0x2e8] sm:$0xff]
    %v444 = vld [vmem:[%s4 + $0x2f0] sm:$0xff]
    %v445 = vld [vmem:[%s4 + $0x2f8] sm:$0xff]
    %v446 = vld [vmem:[%s4 + $0x300] sm:$0xff]
    %v447 = vld [vmem:[%s4 + $0x308] sm:$0xff]
    %v448 = vld [vmem:[%s4 + $0x310] sm:$0xff]
    %v449 = vld [vmem:[%s4 + $0x318] sm:$0xff]
    %v450 = vld [vmem:[%s4 + $0x320] sm:$0xff]
    %v451 = vld [vmem:[%s4 + $0x328] sm:$0xff]
    %v452 = vld [vmem:[%s4 + $0x330] sm:$0xff]
    %v453 = vld [vmem:[%s4 + $0x338] sm:$0xff]
    %v454 = vld [vmem:[%s4 + $0x340] sm:$0xff]
    %v455 = vld [vmem:[%s4 + $0x348] sm:$0xff]
    %v456 = vld [vmem:[%s4 + $0x350] sm:$0xff]
    %v457 = vld [vmem:[%s4 + $0x358] sm:$0xff]
    %v458 = vld [vmem:[%s4 + $0x360] sm:$0xff]
    %v459 = vld [vmem:[%s4 + $0x368] sm:$0xff]
    %v460 = vld [vmem:[%s4 + $0x370] sm:$0xff]
    %v461 = vld [vmem:[%s4 + $0x378] sm:$0xff]
    %v462 = vld [vmem:[%s4 + $0x380] sm:$0xff]
    %v463 = vld [vmem:[%s4 + $0x388] sm:$0xff]
    %v464 = vld [vmem:[%s4 + $0x390] sm:$0xff]
    %v465 = vld [vmem:[%s4 + $0x398] sm:$0xff]
    %v466 = vld [vmem:[%s4 + $0x3a0] sm:$0xff]
    %v467 = vld [vmem:[%s4 + $0x3a8] sm:$0xff]
    %v468 = vld [vmem:[%s4 + $0x3b0] sm:$0xff]
    %v469 = vld [vmem:[%s4 + $0x3b8] sm:$0xff]
    %v470 = vld [vmem:[%s4 + $0x3c0] sm:$0xff]
    %v471 = vld [vmem:[%s4 + $0x3c8] sm:$0xff]
    %v472 = vld [vmem:[%s4 + $0x3d0] sm:$0xff]
    %v473 = vld [vmem:[%s4 + $0x3d8] sm:$0xff]
    %v474 = vld [vmem:[%s4 + $0x3e0] sm:$0xff]
    %v475 = vld [vmem:[%s4 + $0x3e8] sm:$0xff]
    %v476 = vld [vmem:[%s4 + $0x3f0] sm:$0xff]
    %v477 = vld [vmem:[%s4 + $0x3f8] sm:$0xff]
    %v478 = vld [vmem:[%s7] sm:$0x1]
    %v480 = vperm.slane %v478, 0
    %484 = vst [vmem:[#allocation1] ss:$4 sm:$0xff] %v348
    %s485 = scalar_lea.vmem [#allocation1], 32
    %486 = vst [vmem:[%s485] ss:$4 sm:$0xff] %v349
    %v487 = vld.sshfl [vmem:[#allocation1] sm:$0xff pattern:$0x73625140]
    %v488 = vld.sshfl [vmem:[#allocation1 + $0x8] sm:$0xff pattern:$0x73625140]
    %v489 = vld.sshfl [vmem:[#allocation1 + $0x10] sm:$0xff pattern:$0x73625140]
    %v490 = vld.sshfl [vmem:[#allocation1 + $0x18] sm:$0xff pattern:$0x73625140]
    %v491 = vld.sshfl [vmem:[#allocation1 + $0x20] sm:$0xff pattern:$0x73625140]
    %v492 = vld.sshfl [vmem:[#allocation1 + $0x28] sm:$0xff pattern:$0x73625140]
    %v493 = vld.sshfl [vmem:[#allocation1 + $0x30] sm:$0xff pattern:$0x73625140]
    %v494 = vld.sshfl [vmem:[#allocation1 + $0x38] sm:$0xff pattern:$0x73625140]
    %503 = vmatpush.msra.mxu0 %v365
    %504 = vmatpush.msra.mxu0 %v364
    %505 = vmatpush.msra.mxu0 %v363
    %506 = vmatpush.msra.mxu0 %v362
    %507 = vmatpush.msra.mxu0 %v361
    %508 = vmatpush.msra.mxu0 %v360
    %509 = vmatpush.msra.mxu0 %v359
    %510 = vmatpush.msra.mxu0 %v358
    %511 = vmatpush.msra.mxu0 %v357
    %512 = vmatpush.msra.mxu0 %v356
    %513 = vmatpush.msra.mxu0 %v355
    %514 = vmatpush.msra.mxu0 %v354
    %515 = vmatpush.msra.mxu0 %v353
    %516 = vmatpush.msra.mxu0 %v352
    %517 = vmatpush.msra.mxu0 %v351
    %518 = vmatpush.msra.mxu0 %v350
    %519 = vmatmul.f32.gmra.mxu0 %v487
    %v520 = vpop.f32.mrf.mxu0
    %v521 = vadd.f32 %v480, %v520
    %522 = vdwg.mxu0
    %523 = vmatpush.msra.mxu0 %v381
    %524 = vmatpush.msra.mxu0 %v380
    %525 = vmatpush.msra.mxu0 %v379
    %526 = vmatpush.msra.mxu0 %v378
    %527 = vmatpush.msra.mxu0 %v377
    %528 = vmatpush.msra.mxu0 %v376
    %529 = vmatpush.msra.mxu0 %v375
    %530 = vmatpush.msra.mxu0 %v374
    %531 = vmatpush.msra.mxu0 %v373
    %532 = vmatpush.msra.mxu0 %v372
    %533 = vmatpush.msra.mxu0 %v371
    %534 = vmatpush.msra.mxu0 %v370
    %535 = vmatpush.msra.mxu0 %v369
    %536 = vmatpush.msra.mxu0 %v368
    %537 = vmatpush.msra.mxu0 %v367
    %538 = vmatpush.msra.mxu0 %v366
    %539 = vmatmul.f32.gmra.mxu0 %v488
    %v540 = vpop.f32.mrf.mxu0
    %v541 = vadd.f32 %v521, %v540
    %542 = vdwg.mxu0
    %543 = vmatpush.msra.mxu0 %v397
    %544 = vmatpush.msra.mxu0 %v396
    %545 = vmatpush.msra.mxu0 %v395
    %546 = vmatpush.msra.mxu0 %v394
    %547 = vmatpush.msra.mxu0 %v393
    %548 = vmatpush.msra.mxu0 %v392
    %549 = vmatpush.msra.mxu0 %v391
    %550 = vmatpush.msra.mxu0 %v390
    %551 = vmatpush.msra.mxu0 %v389
    %552 = vmatpush.msra.mxu0 %v388
    %553 = vmatpush.msra.mxu0 %v387
    %554 = vmatpush.msra.mxu0 %v386
    %555 = vmatpush.msra.mxu0 %v385
    %556 = vmatpush.msra.mxu0 %v384
    %557 = vmatpush.msra.mxu0 %v383
    %558 = vmatpush.msra.mxu0 %v382
    %559 = vmatmul.f32.gmra.mxu0 %v489
    %v560 = vpop.f32.mrf.mxu0
    %v561 = vadd.f32 %v541, %v560
    %562 = vdwg.mxu0
    %563 = vmatpush.msra.mxu0 %v413
    %564 = vmatpush.msra.mxu0 %v412
    %565 = vmatpush.msra.mxu0 %v411
    %566 = vmatpush.msra.mxu0 %v410
    %567 = vmatpush.msra.mxu0 %v409
    %568 = vmatpush.msra.mxu0 %v408
    %569 = vmatpush.msra.mxu0 %v407
    %570 = vmatpush.msra.mxu0 %v406
    %571 = vmatpush.msra.mxu0 %v405
    %572 = vmatpush.msra.mxu0 %v404
    %573 = vmatpush.msra.mxu0 %v403
    %574 = vmatpush.msra.mxu0 %v402
    %575 = vmatpush.msra.mxu0 %v401
    %576 = vmatpush.msra.mxu0 %v400
    %577 = vmatpush.msra.mxu0 %v399
    %578 = vmatpush.msra.mxu0 %v398
    %579 = vmatmul.f32.gmra.mxu0 %v490
    %v580 = vpop.f32.mrf.mxu0
    %v581 = vadd.f32 %v561, %v580
    %582 = vdwg.mxu0
    %583 = vmatpush.msra.mxu0 %v429
    %584 = vmatpush.msra.mxu0 %v428
    %585 = vmatpush.msra.mxu0 %v427
    %586 = vmatpush.msra.mxu0 %v426
    %587 = vmatpush.msra.mxu0 %v425
    %588 = vmatpush.msra.mxu0 %v424
    %589 = vmatpush.msra.mxu0 %v423
    %590 = vmatpush.msra.mxu0 %v422
    %591 = vmatpush.msra.mxu0 %v421
    %592 = vmatpush.msra.mxu0 %v420
    %593 = vmatpush.msra.mxu0 %v419
    %594 = vmatpush.msra.mxu0 %v418
    %595 = vmatpush.msra.mxu0 %v417
    %596 = vmatpush.msra.mxu0 %v416
    %597 = vmatpush.msra.mxu0 %v415
    %598 = vmatpush.msra.mxu0 %v414
    %599 = vmatmul.f32.gmra.mxu0 %v491
    %v600 = vpop.f32.mrf.mxu0
    %v601 = vadd.f32 %v581, %v600
    %602 = vdwg.mxu0
    %603 = vmatpush.msra.mxu0 %v445
    %604 = vmatpush.msra.mxu0 %v444
    %605 = vmatpush.msra.mxu0 %v443
    %606 = vmatpush.msra.mxu0 %v442
    %607 = vmatpush.msra.mxu0 %v441
    %608 = vmatpush.msra.mxu0 %v440
    %609 = vmatpush.msra.mxu0 %v439
    %610 = vmatpush.msra.mxu0 %v438
    %611 = vmatpush.msra.mxu0 %v437
    %612 = vmatpush.msra.mxu0 %v436
    %613 = vmatpush.msra.mxu0 %v435
    %614 = vmatpush.msra.mxu0 %v434
    %615 = vmatpush.msra.mxu0 %v433
    %616 = vmatpush.msra.mxu0 %v432
    %617 = vmatpush.msra.mxu0 %v431
    %618 = vmatpush.msra.mxu0 %v430
    %619 = vmatmul.f32.gmra.mxu0 %v492
    %v620 = vpop.f32.mrf.mxu0
    %v621 = vadd.f32 %v601, %v620
    %622 = vdwg.mxu0
    %623 = vmatpush.msra.mxu0 %v461
    %624 = vmatpush.msra.mxu0 %v460
    %625 = vmatpush.msra.mxu0 %v459
    %626 = vmatpush.msra.mxu0 %v458
    %627 = vmatpush.msra.mxu0 %v457
    %628 = vmatpush.msra.mxu0 %v456
    %629 = vmatpush.msra.mxu0 %v455
    %630 = vmatpush.msra.mxu0 %v454
    %631 = vmatpush.msra.mxu0 %v453
    %632 = vmatpush.msra.mxu0 %v452
    %633 = vmatpush.msra.mxu0 %v451
    %634 = vmatpush.msra.mxu0 %v450
    %635 = vmatpush.msra.mxu0 %v449
    %636 = vmatpush.msra.mxu0 %v448
    %637 = vmatpush.msra.mxu0 %v447
    %638 = vmatpush.msra.mxu0 %v446
    %639 = vmatmul.f32.gmra.mxu0 %v493
    %v640 = vpop.f32.mrf.mxu0
    %v641 = vadd.f32 %v621, %v640
    %642 = vdwg.mxu0
    %643 = vmatpush.msra.mxu0 %v477
    %644 = vmatpush.msra.mxu0 %v476
    %645 = vmatpush.msra.mxu0 %v475
    %646 = vmatpush.msra.mxu0 %v474
    %647 = vmatpush.msra.mxu0 %v473
    %648 = vmatpush.msra.mxu0 %v472
    %649 = vmatpush.msra.mxu0 %v471
    %650 = vmatpush.msra.mxu0 %v470
    %651 = vmatpush.msra.mxu0 %v469
    %652 = vmatpush.msra.mxu0 %v468
    %653 = vmatpush.msra.mxu0 %v467
    %654 = vmatpush.msra.mxu0 %v466
    %655 = vmatpush.msra.mxu0 %v465
    %656 = vmatpush.msra.mxu0 %v464
    %657 = vmatpush.msra.mxu0 %v463
    %658 = vmatpush.msra.mxu0 %v462
    %659 = vmatmul.f32.gmra.mxu0 %v494
    %v660 = vpop.f32.mrf.mxu0
    %v661 = vadd.f32 %v641, %v660
    %662 = vdwg.mxu0
    %v663 = vld [vmem:[%s2] sm:$0xff]
    %v664 = vld [vmem:[%s2 + $0x8] sm:$0xff]
    %v665 = vld [vmem:[%s5] sm:$0xff]
    %v666 = vld [vmem:[%s5 + $0x8] sm:$0xff]
    %v667 = vld [vmem:[%s5 + $0x10] sm:$0xff]
    %v668 = vld [vmem:[%s5 + $0x18] sm:$0xff]
    %v669 = vld [vmem:[%s5 + $0x20] sm:$0xff]
    %v670 = vld [vmem:[%s5 + $0x28] sm:$0xff]
    %v671 = vld [vmem:[%s5 + $0x30] sm:$0xff]
    %v672 = vld [vmem:[%s5 + $0x38] sm:$0xff]
    %v673 = vld [vmem:[%s5 + $0x40] sm:$0xff]
    %v674 = vld [vmem:[%s5 + $0x48] sm:$0xff]
    %v675 = vld [vmem:[%s5 + $0x50] sm:$0xff]
    %v676 = vld [vmem:[%s5 + $0x58] sm:$0xff]
    %v677 = vld [vmem:[%s5 + $0x60] sm:$0xff]
    %v678 = vld [vmem:[%s5 + $0x68] sm:$0xff]
    %v679 = vld [vmem:[%s5 + $0x70] sm:$0xff]
    %v680 = vld [vmem:[%s5 + $0x78] sm:$0xff]
    %v681 = vld [vmem:[%s5 + $0x80] sm:$0xff]
    %v682 = vld [vmem:[%s5 + $0x88] sm:$0xff]
    %v683 = vld [vmem:[%s5 + $0x90] sm:$0xff]
    %v684 = vld [vmem:[%s5 + $0x98] sm:$0xff]
    %v685 = vld [vmem:[%s5 + $0xa0] sm:$0xff]
    %v686 = vld [vmem:[%s5 + $0xa8] sm:$0xff]
    %v687 = vld [vmem:[%s5 + $0xb0] sm:$0xff]
    %v688 = vld [vmem:[%s5 + $0xb8] sm:$0xff]
    %v689 = vld [vmem:[%s5 + $0xc0] sm:$0xff]
    %v690 = vld [vmem:[%s5 + $0xc8] sm:$0xff]
    %v691 = vld [vmem:[%s5 + $0xd0] sm:$0xff]
    %v692 = vld [vmem:[%s5 + $0xd8] sm:$0xff]
    %v693 = vld [vmem:[%s5 + $0xe0] sm:$0xff]
    %v694 = vld [vmem:[%s5 + $0xe8] sm:$0xff]
    %v695 = vld [vmem:[%s5 + $0xf0] sm:$0xff]
    %v696 = vld [vmem:[%s5 + $0xf8] sm:$0xff]
    %v697 = vld [vmem:[%s5 + $0x100] sm:$0xff]
    %v698 = vld [vmem:[%s5 + $0x108] sm:$0xff]
    %v699 = vld [vmem:[%s5 + $0x110] sm:$0xff]
    %v700 = vld [vmem:[%s5 + $0x118] sm:$0xff]
    %v701 = vld [vmem:[%s5 + $0x120] sm:$0xff]
    %v702 = vld [vmem:[%s5 + $0x128] sm:$0xff]
    %v703 = vld [vmem:[%s5 + $0x130] sm:$0xff]
    %v704 = vld [vmem:[%s5 + $0x138] sm:$0xff]
    %v705 = vld [vmem:[%s5 + $0x140] sm:$0xff]
    %v706 = vld [vmem:[%s5 + $0x148] sm:$0xff]
    %v707 = vld [vmem:[%s5 + $0x150] sm:$0xff]
    %v708 = vld [vmem:[%s5 + $0x158] sm:$0xff]
    %v709 = vld [vmem:[%s5 + $0x160] sm:$0xff]
    %v710 = vld [vmem:[%s5 + $0x168] sm:$0xff]
    %v711 = vld [vmem:[%s5 + $0x170] sm:$0xff]
    %v712 = vld [vmem:[%s5 + $0x178] sm:$0xff]
    %v713 = vld [vmem:[%s5 + $0x180] sm:$0xff]
    %v714 = vld [vmem:[%s5 + $0x188] sm:$0xff]
    %v715 = vld [vmem:[%s5 + $0x190] sm:$0xff]
    %v716 = vld [vmem:[%s5 + $0x198] sm:$0xff]
    %v717 = vld [vmem:[%s5 + $0x1a0] sm:$0xff]
    %v718 = vld [vmem:[%s5 + $0x1a8] sm:$0xff]
    %v719 = vld [vmem:[%s5 + $0x1b0] sm:$0xff]
    %v720 = vld [vmem:[%s5 + $0x1b8] sm:$0xff]
    %v721 = vld [vmem:[%s5 + $0x1c0] sm:$0xff]
    %v722 = vld [vmem:[%s5 + $0x1c8] sm:$0xff]
    %v723 = vld [vmem:[%s5 + $0x1d0] sm:$0xff]
    %v724 = vld [vmem:[%s5 + $0x1d8] sm:$0xff]
    %v725 = vld [vmem:[%s5 + $0x1e0] sm:$0xff]
    %v726 = vld [vmem:[%s5 + $0x1e8] sm:$0xff]
    %v727 = vld [vmem:[%s5 + $0x1f0] sm:$0xff]
    %v728 = vld [vmem:[%s5 + $0x1f8] sm:$0xff]
    %v729 = vld [vmem:[%s5 + $0x200] sm:$0xff]
    %v730 = vld [vmem:[%s5 + $0x208] sm:$0xff]
    %v731 = vld [vmem:[%s5 + $0x210] sm:$0xff]
    %v732 = vld [vmem:[%s5 + $0x218] sm:$0xff]
    %v733 = vld [vmem:[%s5 + $0x220] sm:$0xff]
    %v734 = vld [vmem:[%s5 + $0x228] sm:$0xff]
    %v735 = vld [vmem:[%s5 + $0x230] sm:$0xff]
    %v736 = vld [vmem:[%s5 + $0x238] sm:$0xff]
    %v737 = vld [vmem:[%s5 + $0x240] sm:$0xff]
    %v738 = vld [vmem:[%s5 + $0x248] sm:$0xff]
    %v739 = vld [vmem:[%s5 + $0x250] sm:$0xff]
    %v740 = vld [vmem:[%s5 + $0x258] sm:$0xff]
    %v741 = vld [vmem:[%s5 + $0x260] sm:$0xff]
    %v742 = vld [vmem:[%s5 + $0x268] sm:$0xff]
    %v743 = vld [vmem:[%s5 + $0x270] sm:$0xff]
    %v744 = vld [vmem:[%s5 + $0x278] sm:$0xff]
    %v745 = vld [vmem:[%s5 + $0x280] sm:$0xff]
    %v746 = vld [vmem:[%s5 + $0x288] sm:$0xff]
    %v747 = vld [vmem:[%s5 + $0x290] sm:$0xff]
    %v748 = vld [vmem:[%s5 + $0x298] sm:$0xff]
    %v749 = vld [vmem:[%s5 + $0x2a0] sm:$0xff]
    %v750 = vld [vmem:[%s5 + $0x2a8] sm:$0xff]
    %v751 = vld [vmem:[%s5 + $0x2b0] sm:$0xff]
    %v752 = vld [vmem:[%s5 + $0x2b8] sm:$0xff]
    %v753 = vld [vmem:[%s5 + $0x2c0] sm:$0xff]
    %v754 = vld [vmem:[%s5 + $0x2c8] sm:$0xff]
    %v755 = vld [vmem:[%s5 + $0x2d0] sm:$0xff]
    %v756 = vld [vmem:[%s5 + $0x2d8] sm:$0xff]
    %v757 = vld [vmem:[%s5 + $0x2e0] sm:$0xff]
    %v758 = vld [vmem:[%s5 + $0x2e8] sm:$0xff]
    %v759 = vld [vmem:[%s5 + $0x2f0] sm:$0xff]
    %v760 = vld [vmem:[%s5 + $0x2f8] sm:$0xff]
    %v761 = vld [vmem:[%s5 + $0x300] sm:$0xff]
    %v762 = vld [vmem:[%s5 + $0x308] sm:$0xff]
    %v763 = vld [vmem:[%s5 + $0x310] sm:$0xff]
    %v764 = vld [vmem:[%s5 + $0x318] sm:$0xff]
    %v765 = vld [vmem:[%s5 + $0x320] sm:$0xff]
    %v766 = vld [vmem:[%s5 + $0x328] sm:$0xff]
    %v767 = vld [vmem:[%s5 + $0x330] sm:$0xff]
    %v768 = vld [vmem:[%s5 + $0x338] sm:$0xff]
    %v769 = vld [vmem:[%s5 + $0x340] sm:$0xff]
    %v770 = vld [vmem:[%s5 + $0x348] sm:$0xff]
    %v771 = vld [vmem:[%s5 + $0x350] sm:$0xff]
    %v772 = vld [vmem:[%s5 + $0x358] sm:$0xff]
    %v773 = vld [vmem:[%s5 + $0x360] sm:$0xff]
    %v774 = vld [vmem:[%s5 + $0x368] sm:$0xff]
    %v775 = vld [vmem:[%s5 + $0x370] sm:$0xff]
    %v776 = vld [vmem:[%s5 + $0x378] sm:$0xff]
    %v777 = vld [vmem:[%s5 + $0x380] sm:$0xff]
    %v778 = vld [vmem:[%s5 + $0x388] sm:$0xff]
    %v779 = vld [vmem:[%s5 + $0x390] sm:$0xff]
    %v780 = vld [vmem:[%s5 + $0x398] sm:$0xff]
    %v781 = vld [vmem:[%s5 + $0x3a0] sm:$0xff]
    %v782 = vld [vmem:[%s5 + $0x3a8] sm:$0xff]
    %v783 = vld [vmem:[%s5 + $0x3b0] sm:$0xff]
    %v784 = vld [vmem:[%s5 + $0x3b8] sm:$0xff]
    %v785 = vld [vmem:[%s5 + $0x3c0] sm:$0xff]
    %v786 = vld [vmem:[%s5 + $0x3c8] sm:$0xff]
    %v787 = vld [vmem:[%s5 + $0x3d0] sm:$0xff]
    %v788 = vld [vmem:[%s5 + $0x3d8] sm:$0xff]
    %v789 = vld [vmem:[%s5 + $0x3e0] sm:$0xff]
    %v790 = vld [vmem:[%s5 + $0x3e8] sm:$0xff]
    %v791 = vld [vmem:[%s5 + $0x3f0] sm:$0xff]
    %v792 = vld [vmem:[%s5 + $0x3f8] sm:$0xff]
    %v793 = vld [vmem:[%s8] sm:$0x1]
    %v795 = vperm.slane %v793, 0
    %799 = vst [vmem:[#allocation1] ss:$4 sm:$0xff] %v663
    %s800 = scalar_lea.vmem [#allocation1], 32
    %801 = vst [vmem:[%s800] ss:$4 sm:$0xff] %v664
    %v802 = vld.sshfl [vmem:[#allocation1] sm:$0xff pattern:$0x73625140]
    %v803 = vld.sshfl [vmem:[#allocation1 + $0x8] sm:$0xff pattern:$0x73625140]
    %v804 = vld.sshfl [vmem:[#allocation1 + $0x10] sm:$0xff pattern:$0x73625140]
    %v805 = vld.sshfl [vmem:[#allocation1 + $0x18] sm:$0xff pattern:$0x73625140]
    %v806 = vld.sshfl [vmem:[#allocation1 + $0x20] sm:$0xff pattern:$0x73625140]
    %v807 = vld.sshfl [vmem:[#allocation1 + $0x28] sm:$0xff pattern:$0x73625140]
    %v808 = vld.sshfl [vmem:[#allocation1 + $0x30] sm:$0xff pattern:$0x73625140]
    %v809 = vld.sshfl [vmem:[#allocation1 + $0x38] sm:$0xff pattern:$0x73625140]
    %818 = vmatpush.msra.mxu0 %v680
    %819 = vmatpush.msra.mxu0 %v679
    %820 = vmatpush.msra.mxu0 %v678
    %821 = vmatpush.msra.mxu0 %v677
    %822 = vmatpush.msra.mxu0 %v676
    %823 = vmatpush.msra.mxu0 %v675
    %824 = vmatpush.msra.mxu0 %v674
    %825 = vmatpush.msra.mxu0 %v673
    %826 = vmatpush.msra.mxu0 %v672
    %827 = vmatpush.msra.mxu0 %v671
    %828 = vmatpush.msra.mxu0 %v670
    %829 = vmatpush.msra.mxu0 %v669
    %830 = vmatpush.msra.mxu0 %v668
    %831 = vmatpush.msra.mxu0 %v667
    %832 = vmatpush.msra.mxu0 %v666
    %833 = vmatpush.msra.mxu0 %v665
    %834 = vmatmul.f32.gmra.mxu0 %v802
    %v835 = vpop.f32.mrf.mxu0
    %v836 = vadd.f32 %v795, %v835
    %837 = vdwg.mxu0
    %838 = vmatpush.msra.mxu0 %v696
    %839 = vmatpush.msra.mxu0 %v695
    %840 = vmatpush.msra.mxu0 %v694
    %841 = vmatpush.msra.mxu0 %v693
    %842 = vmatpush.msra.mxu0 %v692
    %843 = vmatpush.msra.mxu0 %v691
    %844 = vmatpush.msra.mxu0 %v690
    %845 = vmatpush.msra.mxu0 %v689
    %846 = vmatpush.msra.mxu0 %v688
    %847 = vmatpush.msra.mxu0 %v687
    %848 = vmatpush.msra.mxu0 %v686
    %849 = vmatpush.msra.mxu0 %v685
    %850 = vmatpush.msra.mxu0 %v684
    %851 = vmatpush.msra.mxu0 %v683
    %852 = vmatpush.msra.mxu0 %v682
    %853 = vmatpush.msra.mxu0 %v681
    %854 = vmatmul.f32.gmra.mxu0 %v803
    %v855 = vpop.f32.mrf.mxu0
    %v856 = vadd.f32 %v836, %v855
    %857 = vdwg.mxu0
    %858 = vmatpush.msra.mxu0 %v712
    %859 = vmatpush.msra.mxu0 %v711
    %860 = vmatpush.msra.mxu0 %v710
    %861 = vmatpush.msra.mxu0 %v709
    %862 = vmatpush.msra.mxu0 %v708
    %863 = vmatpush.msra.mxu0 %v707
    %864 = vmatpush.msra.mxu0 %v706
    %865 = vmatpush.msra.mxu0 %v705
    %866 = vmatpush.msra.mxu0 %v704
    %867 = vmatpush.msra.mxu0 %v703
    %868 = vmatpush.msra.mxu0 %v702
    %869 = vmatpush.msra.mxu0 %v701
    %870 = vmatpush.msra.mxu0 %v700
    %871 = vmatpush.msra.mxu0 %v699
    %872 = vmatpush.msra.mxu0 %v698
    %873 = vmatpush.msra.mxu0 %v697
    %874 = vmatmul.f32.gmra.mxu0 %v804
    %v875 = vpop.f32.mrf.mxu0
    %v876 = vadd.f32 %v856, %v875
    %877 = vdwg.mxu0
    %878 = vmatpush.msra.mxu0 %v728
    %879 = vmatpush.msra.mxu0 %v727
    %880 = vmatpush.msra.mxu0 %v726
    %881 = vmatpush.msra.mxu0 %v725
    %882 = vmatpush.msra.mxu0 %v724
    %883 = vmatpush.msra.mxu0 %v723
    %884 = vmatpush.msra.mxu0 %v722
    %885 = vmatpush.msra.mxu0 %v721
    %886 = vmatpush.msra.mxu0 %v720
    %887 = vmatpush.msra.mxu0 %v719
    %888 = vmatpush.msra.mxu0 %v718
    %889 = vmatpush.msra.mxu0 %v717
    %890 = vmatpush.msra.mxu0 %v716
    %891 = vmatpush.msra.mxu0 %v715
    %892 = vmatpush.msra.mxu0 %v714
    %893 = vmatpush.msra.mxu0 %v713
    %894 = vmatmul.f32.gmra.mxu0 %v805
    %v895 = vpop.f32.mrf.mxu0
    %v896 = vadd.f32 %v876, %v895
    %897 = vdwg.mxu0
    %898 = vmatpush.msra.mxu0 %v744
    %899 = vmatpush.msra.mxu0 %v743
    %900 = vmatpush.msra.mxu0 %v742
    %901 = vmatpush.msra.mxu0 %v741
    %902 = vmatpush.msra.mxu0 %v740
    %903 = vmatpush.msra.mxu0 %v739
    %904 = vmatpush.msra.mxu0 %v738
    %905 = vmatpush.msra.mxu0 %v737
    %906 = vmatpush.msra.mxu0 %v736
    %907 = vmatpush.msra.mxu0 %v735
    %908 = vmatpush.msra.mxu0 %v734
    %909 = vmatpush.msra.mxu0 %v733
    %910 = vmatpush.msra.mxu0 %v732
    %911 = vmatpush.msra.mxu0 %v731
    %912 = vmatpush.msra.mxu0 %v730
    %913 = vmatpush.msra.mxu0 %v729
    %914 = vmatmul.f32.gmra.mxu0 %v806
    %v915 = vpop.f32.mrf.mxu0
    %v916 = vadd.f32 %v896, %v915
    %917 = vdwg.mxu0
    %918 = vmatpush.msra.mxu0 %v760
    %919 = vmatpush.msra.mxu0 %v759
    %920 = vmatpush.msra.mxu0 %v758
    %921 = vmatpush.msra.mxu0 %v757
    %922 = vmatpush.msra.mxu0 %v756
    %923 = vmatpush.msra.mxu0 %v755
    %924 = vmatpush.msra.mxu0 %v754
    %925 = vmatpush.msra.mxu0 %v753
    %926 = vmatpush.msra.mxu0 %v752
    %927 = vmatpush.msra.mxu0 %v751
    %928 = vmatpush.msra.mxu0 %v750
    %929 = vmatpush.msra.mxu0 %v749
    %930 = vmatpush.msra.mxu0 %v748
    %931 = vmatpush.msra.mxu0 %v747
    %932 = vmatpush.msra.mxu0 %v746
    %933 = vmatpush.msra.mxu0 %v745
    %934 = vmatmul.f32.gmra.mxu0 %v807
    %v935 = vpop.f32.mrf.mxu0
    %v936 = vadd.f32 %v916, %v935
    %937 = vdwg.mxu0
    %938 = vmatpush.msra.mxu0 %v776
    %939 = vmatpush.msra.mxu0 %v775
    %940 = vmatpush.msra.mxu0 %v774
    %941 = vmatpush.msra.mxu0 %v773
    %942 = vmatpush.msra.mxu0 %v772
    %943 = vmatpush.msra.mxu0 %v771
    %944 = vmatpush.msra.mxu0 %v770
    %945 = vmatpush.msra.mxu0 %v769
    %946 = vmatpush.msra.mxu0 %v768
    %947 = vmatpush.msra.mxu0 %v767
    %948 = vmatpush.msra.mxu0 %v766
    %949 = vmatpush.msra.mxu0 %v765
    %950 = vmatpush.msra.mxu0 %v764
    %951 = vmatpush.msra.mxu0 %v763
    %952 = vmatpush.msra.mxu0 %v762
    %953 = vmatpush.msra.mxu0 %v761
    %954 = vmatmul.f32.gmra.mxu0 %v808
    %v955 = vpop.f32.mrf.mxu0
    %v956 = vadd.f32 %v936, %v955
    %957 = vdwg.mxu0
    %958 = vmatpush.msra.mxu0 %v792
    %959 = vmatpush.msra.mxu0 %v791
    %960 = vmatpush.msra.mxu0 %v790
    %961 = vmatpush.msra.mxu0 %v789
    %962 = vmatpush.msra.mxu0 %v788
    %963 = vmatpush.msra.mxu0 %v787
    %964 = vmatpush.msra.mxu0 %v786
    %965 = vmatpush.msra.mxu0 %v785
    %966 = vmatpush.msra.mxu0 %v784
    %967 = vmatpush.msra.mxu0 %v783
    %968 = vmatpush.msra.mxu0 %v782
    %969 = vmatpush.msra.mxu0 %v781
    %970 = vmatpush.msra.mxu0 %v780
    %971 = vmatpush.msra.mxu0 %v779
    %972 = vmatpush.msra.mxu0 %v778
    %973 = vmatpush.msra.mxu0 %v777
    %974 = vmatmul.f32.gmra.mxu0 %v809
    %v975 = vpop.f32.mrf.mxu0
    %v976 = vadd.f32 %v956, %v975
    %977 = vdwg.mxu0
    %vm978 = vcmask 123904
    %v979 = vsel %vm978, %v346, -inf
    %v980 = vsel %vm978, %v661, -inf
    %v981 = vsel %vm978, %v976, -inf
    %v982 = vmax.f32 %v979, %v980
    %v983 = vmax.f32 %v982, %v981
    %v984 = vsub.f32 %v346, %v983
    %v985 = vsub.f32 %v661, %v983
    %v986 = vsub.f32 %v976, %v983
    %v987 = vmul.f32 %v984, 1.442695
    %v988 = vpow.pop %v987
    %v989 = vmul.f32 %v985, 1.442695
    %v990 = vpow.pop %v989
    %v991 = vmul.f32 %v986, 1.442695
    %v992 = vpow.pop %v991
    %v993 = vsel %vm978, %v988, 0.0
    %v994 = vsel %vm978, %v990, 0.0
    %v995 = vadd.f32 %v993, %v994
    %v996 = vsel %vm978, %v992, 0.0
    %v997 = vadd.f32 %v995, %v996
    %v998 = vrcp.pop %v997
    %v999 = vmul.f32 %v997, %v998
    %v1000 = vsub.f32 1.0, %v999
    %v1001 = vmul.f32 %v998, %v1000
    %v1002 = vadd.f32 %v998, %v1001
    %vm1003 = vweird.f32 %v997
    %vm1004 = vweird.f32 %v998
    %vm1005 = vmor %vm1003, %vm1004
    %v1006 = vsel %vm1005, %v998, %v1002
    %v1007 = vand.u32 2147483647, %v997
    %vm1008 = vcmp.eq.f32.partialorder %v1007, 8.507059e+37
    %v1009 = vand.u32 %v997, 2147483648
    %v1010 = vor.u32 1.1754944e-38, %v1009
    %v1011 = vsel %vm1008, %v1010, %v1006
    %v1012 = vmul.f32 %v988, %v1011
    %v1013 = vmul.f32 %v990, %v1011
    %v1014 = vmul.f32 %v992, %v1011
    %1015 = vst.msk [vmem:[#allocation2] sm:$0x3] %vm978, %v1012
    %1016 = vst.msk [vmem:[#allocation2 + $0x2] sm:$0x3] %vm978, %v1013
    %1017 = vst.msk [vmem:[#allocation2 + $0x4] sm:$0x3] %vm978, %v1014
    // Predicated region
    $region38: #{tpu_custom_call.1} parent=1 // pred_check
      _
    $region39: #{tpu_custom_call.1} parent=1 // pred_check_branch
      %1019 = sbr.rel (0) target = $region41
    $region40: #{tpu_custom_call.1} parent=1 // pred_region
      %1021 = vsyncadd [#allocation3], 0
      %s1022 = sshll.u32 [#allocation2], 4
      %s1023 = int_to_ptr.vmem [resolvable:$true] %s1022
      %s1024 = sshll.u32 %s9, 4
      %s1025 = int_to_ptr.hbm [resolvable:$true] %s1024
      %1030 = dma.vmem_to_hbm [thread:$0]  %s1023, 96, %s1025, [#allocation3], 32, 32, 2
    $region41: #{tpu_custom_call.1} parent=1 // pred_fallthru
      _
    // Predicated region
    $region42: #{tpu_custom_call.1} parent=1 // pred_check
      _
    $region43: #{tpu_custom_call.1} parent=1 // pred_check_branch
      %1032 = sbr.rel (0) target = $region45
    $region44: #{tpu_custom_call.1} parent=1 // pred_region
      %1034 = dma.done [#allocation3], 96
    $region45: #{tpu_custom_call.1} parent=1 // pred_fallthru
      _
    %1035 = vsyncpa [#allocation3], 1

</llo_original>
